<compile_context>
chip_gen: v6e
topology: v6e:2x2x1
jax: 0.10.0
libtpu: 0.0.40
codegen_flags: <defaults>
</compile_context>

<pallas_src>
from functools import partial

import jax
import jax.numpy as jnp
from jax import lax
from jax.experimental import pallas as pl
from jax.experimental.pallas import tpu as pltpu

LANES = 128
SUBLANE_MULT = 32                   # covers f32 (8), bf16 (16), int8/fp8 (32) packing
MIN_CHUNK = SUBLANE_MULT * LANES    # 4096 elems: max wrapper-side zero pad (<=16 KiB)


def _round_up(x, m):
    return ((x + m - 1) // m) * m


def _max_tile_rows():
    """Per-generation tile height (rows of 128 lanes)."""
    try:
        kind = jax.devices()[0].device_kind.lower()
    except Exception:
        kind = ""
    # v7x: 3.2 TB/s HBM makes the ~0.35us per-step overhead visible at 1K rows;
    # 8192x128xf32 = 4 MiB per input per buffer, comfortably inside scoped VMEM.
    # v5e/v6e: 2048 rows already sits at ~85% of the HBM roofline.
    return 8192 if "v7" in kind else 2048


def _focal_kernel(x_ref, t_ref, o_ref, acc_ref, *,
                  gamma, n_valid, steps_per_split, full_blocks,
                  emit_full, emit_masked, scale):
    """Fused BCE-with-logits + focal modulation + partial mean over one tile.

    acc_ref: (8, 128) f32 VMEM scratch of partial sums, reset at i == 0.
    o_ref  : (1, 1) per-split output, written only on the last step of a split.
    """
    c = pl.program_id(0)               # "parallel" split axis (2 TCs on v7x)
    i = pl.program_id(1)               # reduction axis within the split
    g = c * steps_per_split + i        # global (unclamped) row-block index

    @pl.when(i == 0)
    def _init():
        acc_ref[...] = jnp.zeros_like(acc_ref)

    x = x_ref[...].astype(jnp.float32)
    t = t_ref[...].astype(jnp.float32)
    rows, lanes = x.shape

    # Numerically stable binary_cross_entropy_with_logits (reduction='none').
    bce = jnp.maximum(x, 0.0) - x * t + jnp.log1p(jnp.exp(-jnp.abs(x)))

    # Focal modulation; alpha and 1/N are folded into the final scalar `scale`.
    pt = jnp.exp(-bce)
    one_minus_pt = 1.0 - pt
    if float(gamma) == int(gamma) and int(gamma) >= 0:
        gi = int(gamma)
        if gi == 0:
            fl = bce
        else:
            mod = one_minus_pt                 # no mul-by-ones
            for _ in range(gi - 1):
                mod = mod * one_minus_pt
            fl = mod * bce
    else:
        fl = (one_minus_pt ** gamma) * bce

    def accumulate(v):
        # (rows, 128) -> (8, 128) partial sums: pure vreg adds, no XLU reduce
        # and no loop-carried scalar dependency on the output.
        acc_ref[...] += jnp.sum(v.reshape(rows // 8, 8, lanes), axis=0)

    def masked_accumulate():
        row_ids = lax.broadcasted_iota(jnp.int32, (rows, lanes), 0)
        col_ids = lax.broadcasted_iota(jnp.int32, (rows, lanes), 1)
        idx_in_block = row_ids * lanes + col_ids
        thresh = n_valid - g * (rows * lanes)   # scalar; <= 0 when block fully invalid
        # Select (not multiply) so inf/NaN from undefined OOB rows cannot leak.
        accumulate(jnp.where(idx_in_block < thresh, fl, 0.0))

    if emit_full and emit_masked:
        @pl.when(g < full_blocks)               # fully-valid blocks: no mask math
        def _full():
            accumulate(fl)

        @pl.when(g >= full_blocks)              # ragged / overhang blocks only
        def _masked():
            masked_accumulate()
    elif emit_full:
        accumulate(fl)
    else:
        masked_accumulate()

    @pl.when(i == steps_per_split - 1)
    def _finalize():
        o_ref[...] = (jnp.sum(acc_ref[...]) * scale).reshape(1, 1)


def focal_loss(inputs, targets, alpha=0.25, gamma=2.0, *, _tile_rows_override=None):
    """Pallas TPU focal loss. inputs/targets: same arbitrary shape -> scalar."""
    assert inputs.shape == targets.shape
    x = inputs.reshape(-1)                      # native dtype, no upcast copy
    t = targets.reshape(-1)
    n = x.shape[0]
    assert n > 0

    # Lane-dense (rows, 128) layout; pad at most MIN_CHUNK-1 zeros (never to a
    # full tile multiple).  Fast path: no pad at all when already aligned.
    n_pad = _round_up(n, MIN_CHUNK)
    if n_pad != n:
        x = jnp.pad(x, (0, n_pad - n))
        t = jnp.pad(t, (0, n_pad - n))
    rows = n_pad // LANES                       # multiple of SUBLANE_MULT
    x = x.reshape(rows, LANES)
    t = t.reshape(rows, LANES)

    max_tile = _tile_rows_override if _tile_rows_override is not None else _max_tile_rows()
    max_tile = max(SUBLANE_MULT, _round_up(int(max_tile), SUBLANE_MULT))
    tile_rows = min(max_tile, rows)

    nb = pl.cdiv(rows, tile_rows)               # real row-blocks (last may be ragged)
    num_splits = 2 if nb >= 2 else 1            # leading "parallel" axis (2 TCs on v7x)
    spc = pl.cdiv(nb, num_splits)               # steps per split

    block_elems = tile_rows * LANES
    full_blocks = n // block_elems              # blocks containing no invalid element
    max_g = num_splits * spc - 1
    emit_full = full_blocks > 0
    emit_masked = full_blocks <= max_g

    # Clamp the block index so the overhang step of an uneven split re-reads a
    # valid block instead of DMA-ing out of bounds; its contribution is zeroed
    # in-kernel via the unclamped global index.
    def idx_map(c, i):
        return (jnp.minimum(c * spc + i, nb - 1), 0)

    kernel = partial(
        _focal_kernel,
        gamma=float(gamma),
        n_valid=int(n),
        steps_per_split=int(spc),
        full_blocks=int(full_blocks),
        emit_full=bool(emit_full),
        emit_masked=bool(emit_masked),
        scale=float(alpha) / float(n),
    )

    out = pl.pallas_call(
        kernel,
        out_shape=jax.ShapeDtypeStruct((num_splits, 1), jnp.float32),
        grid=(num_splits, spc),
        in_specs=[
            pl.BlockSpec((tile_rows, LANES), idx_map),
            pl.BlockSpec((tile_rows, LANES), idx_map),
        ],
        out_specs=pl.BlockSpec((1, 1), lambda c, i: (c, 0)),
        scratch_shapes=[pltpu.VMEM((8, LANES), jnp.float32)],
        compiler_params=pltpu.CompilerParams(
            dimension_semantics=("parallel", "arbitrary"),
        ),
        cost_estimate=pl.CostEstimate(
            flops=15 * n,
            transcendentals=3 * n,
            bytes_accessed=n * (x.dtype.itemsize + t.dtype.itemsize) + 4 * num_splits,
        ),
    )(x, t)
    return jnp.sum(out)                          # combine per-split partials (scalar)


def focal_loss_ref(inputs, targets, alpha=0.25, gamma=2.0):
    """Pure-JAX reference mirroring the PyTorch module."""
    x = inputs.astype(jnp.float32)
    t = targets.astype(jnp.float32)
    bce = jnp.maximum(x, 0.0) - x * t + jnp.log1p(jnp.exp(-jnp.abs(x)))
    pt = jnp.exp(-bce)
    return jnp.mean(alpha * (1.0 - pt) ** gamma * bce)


if __name__ == "__main__":
    key = jax.random.PRNGKey(0)
    k1, k2, k3, k4 = jax.random.split(key, 4)

    # Case 1: tiny (batch, 1) binary-classification logits (as used with this
    # loss in the original script), f32, single partial block.
    logits = jax.random.normal(k1, (32, 1), jnp.float32)
    targets = jax.random.bernoulli(k2, 0.5, (32, 1)).astype(jnp.float32)
    loss = jax.jit(focal_loss)(logits, targets)
    jax.block_until_ready(loss)
    ref = focal_loss_ref(logits, targets)
    assert loss.shape == () and loss.dtype == jnp.float32
    assert jnp.allclose(loss, ref, rtol=1e-4, atol=1e-6), (loss, ref)

    # Case 2: bf16 segmentation-style logits with a ragged last block; small
    # tiles forced so the multi-block + two-way "parallel" split + masked-tail
    # paths are all exercised at small shapes.
    shape2 = (3, 1, 64, 65)
    logits2 = jax.random.normal(k3, shape2, jnp.bfloat16)
    targets2 = jax.random.bernoulli(k4, 0.5, shape2).astype(jnp.bfloat16)
    loss2 = jax.jit(partial(focal_loss, _tile_rows_override=32))(logits2, targets2)
    jax.block_until_ready(loss2)
    ref2 = focal_loss_ref(logits2, targets2)
    assert jnp.allclose(loss2, ref2, rtol=2e-3, atol=1e-5), (loss2, ref2)

    print("KERNEL_OK")
</pallas_src>

<mosaic_0001>
module attributes {stable_mosaic.version = 11 : i64} {
  func.func @_focal_kernel(%arg0: i32, %arg1: i32, %arg2: memref<32x128xf32, #tpu.memory_space<vmem>>, %arg3: memref<32x128xf32, #tpu.memory_space<vmem>>, %arg4: memref<1x1xf32, #tpu.memory_space<vmem>>, %arg5: memref<8x128xf32, #tpu.memory_space<vmem>>) attributes {dimension_semantics = [#tpu.dimension_semantics<parallel>, #tpu.dimension_semantics<arbitrary>], iteration_bounds = array<i64: 1, 1>, scalar_prefetch = 0 : i64, scratch_operands = 1 : i64, tpu.core_type = #tpu.core_type<tc>, window_params = [{transform_indices = @transform_0, window_bounds = array<i64: 32, 128>}, {transform_indices = @transform_1, window_bounds = array<i64: 32, 128>}, {transform_indices = @transform_2, window_bounds = array<i64: 1, 1>}]} {
    %c1_i32 = arith.constant 1 : i32
    %0 = arith.muli %arg0, %c1_i32 : i32
    %1 = arith.addi %0, %arg1 : i32
    %c0_i32 = arith.constant 0 : i32
    %2 = arith.cmpi eq, %arg1, %c0_i32 : i32
    %3 = arith.extui %2 : i1 to i32
    %c0_i32_0 = arith.constant 0 : i32
    %4 = arith.cmpi ne, %3, %c0_i32_0 : i32
    scf.if %4 {
      %cst_15 = arith.constant 0.000000e+00 : f32
      %43 = vector.broadcast %cst_15 : f32 to vector<8x128xf32>
      %c0_16 = arith.constant 0 : index
      %c0_17 = arith.constant 0 : index
      %44 = vector.load %arg5[%c0_16, %c0_17] : memref<8x128xf32, #tpu.memory_space<vmem>>, vector<8x128xf32>
      tpu.vector_store %arg5[%c0_16, %c0_17], %43 {strides = array<i32>} : memref<8x128xf32, #tpu.memory_space<vmem>>, vector<8x128xf32>,
    } else {
    }
    %c0 = arith.constant 0 : index
    %c0_1 = arith.constant 0 : index
    %5 = vector.load %arg2[%c0, %c0_1] : memref<32x128xf32, #tpu.memory_space<vmem>>, vector<32x128xf32>
    %c0_2 = arith.constant 0 : index
    %c0_3 = arith.constant 0 : index
    %6 = vector.load %arg3[%c0_2, %c0_3] : memref<32x128xf32, #tpu.memory_space<vmem>>, vector<32x128xf32>
    %cst = arith.constant 0.000000e+00 : f32
    %7 = vector.broadcast %cst : f32 to vector<32x128xf32>
    %8 = arith.maximumf %5, %7 : vector<32x128xf32>
    %9 = arith.mulf %5, %6 : vector<32x128xf32>
    %10 = arith.subf %8, %9 : vector<32x128xf32>
    %11 = math.absf %5 : vector<32x128xf32>
    %cst_4 = arith.constant 0.000000e+00 : f32
    %12 = vector.broadcast %cst_4 : f32 to vector<32x128xf32>
    %13 = arith.subf %12, %11 : vector<32x128xf32>
    %14 = math.exp %13 : vector<32x128xf32>
    %15 = math.log1p %14 : vector<32x128xf32>
    %16 = arith.addf %10, %15 : vector<32x128xf32>
    %cst_5 = arith.constant 0.000000e+00 : f32
    %17 = vector.broadcast %cst_5 : f32 to vector<32x128xf32>
    %18 = arith.subf %17, %16 : vector<32x128xf32>
    %19 = math.exp %18 : vector<32x128xf32>
    %cst_6 = arith.constant 1.000000e+00 : f32
    %20 = vector.broadcast %cst_6 : f32 to vector<32x128xf32>
    %21 = arith.subf %20, %19 : vector<32x128xf32>
    %22 = arith.mulf %21, %21 : vector<32x128xf32>
    %23 = arith.mulf %22, %16 : vector<32x128xf32>
    %24 = tpu.iota {dimensions = array<i32: 0>} : vector<32x128xi32>
    %25 = tpu.iota {dimensions = array<i32: 1>} : vector<32x128xi32>
    %c128_i32 = arith.constant 128 : i32
    %26 = vector.broadcast %c128_i32 : i32 to vector<32x128xi32>
    %27 = arith.muli %24, %26 : vector<32x128xi32>
    %28 = arith.addi %27, %25 : vector<32x128xi32>
    %c4096_i32 = arith.constant 4096 : i32
    %29 = arith.muli %1, %c4096_i32 : i32
    %c32_i32 = arith.constant 32 : i32
    %30 = arith.subi %c32_i32, %29 : i32
    %31 = vector.broadcast %30 : i32 to vector<32x128xi32>
    %32 = arith.cmpi slt, %28, %31 : vector<32x128xi32>
    %cst_7 = arith.constant 0.000000e+00 : f32
    %33 = vector.broadcast %cst_7 : f32 to vector<32x128xf32>
    %34 = arith.select %32, %23, %33 : vector<32x128xi1>, vector<32x128xf32>
    %c0_8 = arith.constant 0 : index
    %c0_9 = arith.constant 0 : index
    %35 = vector.load %arg5[%c0_8, %c0_9] : memref<8x128xf32, #tpu.memory_space<vmem>>, vector<8x128xf32>
    %36 = vector.shape_cast %34 : vector<32x128xf32> to vector<4x8x128xf32>
    %cst_10 = arith.constant dense<0.000000e+00> : vector<8x128xf32>
    %37 = vector.multi_reduction <add>, %36, %cst_10 [0] : vector<4x8x128xf32> to vector<8x128xf32>
    %38 = arith.addf %35, %37 : vector<8x128xf32>
    %c0_11 = arith.constant 0 : index
    %c0_12 = arith.constant 0 : index
    %39 = vector.load %arg5[%c0_11, %c0_12] : memref<8x128xf32, #tpu.memory_space<vmem>>, vector<8x128xf32>
    tpu.vector_store %arg5[%c0_11, %c0_12], %38 {strides = array<i32>} : memref<8x128xf32, #tpu.memory_space<vmem>>, vector<8x128xf32>,
    %c0_i32_13 = arith.constant 0 : i32
    %40 = arith.cmpi eq, %arg1, %c0_i32_13 : i32
    %41 = arith.extui %40 : i1 to i32
    %c0_i32_14 = arith.constant 0 : i32
    %42 = arith.cmpi ne, %41, %c0_i32_14 : i32
    scf.if %42 {
      %c0_15 = arith.constant 0 : index
      %c0_16 = arith.constant 0 : index
      %43 = vector.load %arg5[%c0_15, %c0_16] : memref<8x128xf32, #tpu.memory_space<vmem>>, vector<8x128xf32>
      %44 = vector.shape_cast %43 : vector<8x128xf32> to vector<1x8x128xf32>
      %cst_17 = arith.constant dense<0.000000e+00> : vector<1xf32>
      %45 = vector.multi_reduction <add>, %44, %cst_17 [1, 2] : vector<1x8x128xf32> to vector<1xf32>
      %46 = vector.shape_cast %45 : vector<1xf32> to vector<1x1x1xf32>
      %47 = vector.extract %46[0, 0, 0] : f32 from vector<1x1x1xf32>
      %cst_18 = arith.constant 7.812500e-03 : f32
      %48 = arith.mulf %47, %cst_18 : f32
      %49 = vector.broadcast %48 : f32 to vector<1x1xf32>
      %c0_19 = arith.constant 0 : index
      %c0_20 = arith.constant 0 : index
      %50 = vector.load %arg4[%c0_19, %c0_20] : memref<1x1xf32, #tpu.memory_space<vmem>>, vector<1x1xf32>
      tpu.vector_store %arg4[%c0_19, %c0_20], %49 {strides = array<i32>} : memref<1x1xf32, #tpu.memory_space<vmem>>, vector<1x1xf32>,
    } else {
    }
    return
  }
  func.func @transform_0(%arg0: i32, %arg1: i32) -> (i32, i32) {
    %c1_i32 = arith.constant 1 : i32
    %0 = arith.muli %arg0, %c1_i32 : i32
    %1 = arith.addi %0, %arg1 : i32
    %c0_i32 = arith.constant 0 : i32
    %2 = arith.minsi %1, %c0_i32 : i32
    %c0_i32_0 = arith.constant 0 : i32
    %c0_i32_1 = arith.constant 0 : i32
    return %2, %c0_i32_0 : i32, i32
  }
  func.func @transform_1(%arg0: i32, %arg1: i32) -> (i32, i32) {
    %c1_i32 = arith.constant 1 : i32
    %0 = arith.muli %arg0, %c1_i32 : i32
    %1 = arith.addi %0, %arg1 : i32
    %c0_i32 = arith.constant 0 : i32
    %2 = arith.minsi %1, %c0_i32 : i32
    %c0_i32_0 = arith.constant 0 : i32
    %c0_i32_1 = arith.constant 0 : i32
    return %2, %c0_i32_0 : i32, i32
  }
  func.func @transform_2(%arg0: i32, %arg1: i32) -> (i32, i32) {
    %c0_i32 = arith.constant 0 : i32
    %c0_i32_0 = arith.constant 0 : i32
    return %arg0, %c0_i32 : i32, i32
  }
}

</mosaic_0001>

<llo_original>
// kernel: focal_loss.1
$region0: #{focal_loss.1}
  #allocation0 [shape = 'u32[]', space=smem, size = 0x4, offset = 0x4, fixed_abs, tag = 'smem constant byte address 0x4 - core index']
  #allocation1 [shape = 'u32[144,128]{1,0:T(1,128)}', space=vmem, size = 0x12000, scoped, tag = 'internal scratch']
  #allocation2 [shape = 'f32[8,128]{1,0:T(8,128)}', space=vmem, size = 0x1000, scoped, tag = 'scratch operand']
  %s0 = inlined_call_operand.vmem [shape: f32[32,128], index: 0, kind: input, shape index: {}]
  %s1 = inlined_call_operand.vmem [shape: f32[32,128], index: 1, kind: input, shape index: {}]
  %s2 = inlined_call_operand.hbm [shape: f32[1,1], index: 2, kind: output, shape index: {}]
  %s3 = sld [smem:[#allocation0]]
  $region26: #{focal_loss.1} parent=0
    _
  %s5 = ssub.s32 1, %s3
  %s6 = scalar_select 0, %s5, %s3
  $region1: #{focal_loss.1} parent=0
    #allocation3 [shape = 'u8[512]{0}', space=vmem, size = 0x400, scoped, tag = 'output window, operand 0, single buffered']
    #allocation4 [shape = 's32[1]{0}', space=sflag, size = 0x4, scoped, tag = 'scoped memory for focal_loss.1']
    %7 = vsyncpa [#allocation4], 0
    // Predicated region
    $region2: #{focal_loss.1} parent=1 // pred_check
      _
    $region3: #{focal_loss.1} parent=1 // pred_check_branch
      %9 = sbr.rel (0) target = $region5
    $region4: #{focal_loss.1} parent=1 // pred_region
      %s10 = sadd.s32 0, 0
      %p11 = scmp.lt.s32.totalorder %s10, 0
      %s12 = scalar_select %p11, %s10, 0
      %s13 = smul.u32 4, %s12
      %p14 = scmp.lt.s32.totalorder %s13, 3
      %s15 = scalar_select %p14, %s13, 3
      %s16 = smul.addr %s15, 8
      %s17 = scalar_lea.vmem %s0, %s16
      %s18 = sadd.s32 0, 0
      %p19 = scmp.lt.s32.totalorder %s18, 0
      %s20 = scalar_select %p19, %s18, 0
      %s21 = smul.u32 4, %s20
    $region5: #{focal_loss.1} parent=1 // pred_fallthru
      _
    // Predicated region
    $region6: #{focal_loss.1} parent=1 // pred_check
      _
    $region7: #{focal_loss.1} parent=1 // pred_check_branch
      %23 = sbr.rel (0) target = $region9
    $region8: #{focal_loss.1} parent=1 // pred_region
      %s24 = sadd.s32 0, 0
      %p25 = scmp.lt.s32.totalorder %s24, 0
      %s26 = scalar_select %p25, %s24, 0
      %s27 = smul.u32 4, %s26
      %p28 = scmp.lt.s32.totalorder %s27, 3
      %s29 = scalar_select %p28, %s27, 3
      %s30 = smul.addr %s29, 8
      %s31 = scalar_lea.vmem %s1, %s30
      %s32 = sadd.s32 0, 0
      %p33 = scmp.lt.s32.totalorder %s32, 0
      %s34 = scalar_select %p33, %s32, 0
      %s35 = smul.u32 4, %s34
    $region9: #{focal_loss.1} parent=1 // pred_fallthru
      _
    %s36 = sadd.s32 0, 0
    %p37 = scmp.lt.s32.totalorder %s36, 0
    %s38 = scalar_select %p37, %s36, 0
    %s39 = smul.u32 4, %s38
    %p40 = scmp.lt.s32.totalorder %s39, 3
    %s41 = scalar_select %p40, %s39, 3
    %s42 = smul.addr %s41, 8
    %s43 = scalar_lea.vmem %s0, %s42
    %s44 = sadd.s32 0, 0
    %p45 = scmp.lt.s32.totalorder %s44, 0
    %s46 = scalar_select %p45, %s44, 0
    %s47 = smul.u32 4, %s46
    %p48 = scmp.lt.s32.totalorder %s47, 3
    %s49 = scalar_select %p48, %s47, 3
    %s50 = smul.addr %s49, 8
    %s51 = scalar_lea.vmem %s1, %s50
    %s52 = sadd.s32 0, 0
    %p53 = scmp.lt.s32.totalorder %s52, 0
    %s54 = scalar_select %p53, %s52, 0
    %s55 = smul.u32 4, %s54
    %p56 = scmp.lt.s32.totalorder %s55, 3
    %s57 = scalar_select %p56, %s55, 3
    %s58 = smul.addr %s57, 8
    %s59 = scalar_lea.vmem %s0, %s58
    %s60 = sadd.s32 0, 0
    %p61 = scmp.lt.s32.totalorder %s60, 0
    %s62 = scalar_select %p61, %s60, 0
    %s63 = smul.u32 4, %s62
    %s64 = sadd.s32 0, 0
    %p65 = scmp.lt.s32.totalorder %s64, 0
    %s66 = scalar_select %p65, %s64, 0
    %s67 = smul.u32 4, %s66
    %p68 = scmp.lt.s32.totalorder %s67, 3
    %s69 = scalar_select %p68, %s67, 3
    %s70 = smul.addr %s69, 8
    %s71 = scalar_lea.vmem %s1, %s70
    %s72 = sadd.s32 0, 0
    %p73 = scmp.lt.s32.totalorder %s72, 0
    %s74 = scalar_select %p73, %s72, 0
    %s75 = smul.u32 4, %s74
    %s76 = sadd.s32 0, 0
    %p77 = scmp.eq.s32.totalorder 0, 0
    // Predicated region
    $region10: #{focal_loss.1} parent=1 // pred_check
      %p78 = pneg %p77
    $region11: #{focal_loss.1} parent=1 // pred_check_branch
      %80 = sbr.rel (%p78) target = $region13
    $region12: #{focal_loss.1} parent=1 // pred_region
      %81 = vst [vmem:[#allocation2] sm:$0xff] 0.0
    $region13: #{focal_loss.1} parent=1 // pred_fallthru
      _
    %v82 = vld [vmem:[%s59] sm:$0xff]
    %v83 = vld [vmem:[%s59 + $0x8] sm:$0xff]
    %v84 = vld [vmem:[%s59 + $0x10] sm:$0xff]
    %v85 = vld [vmem:[%s59 + $0x18] sm:$0xff]
    %v86 = vld [vmem:[%s71] sm:$0xff]
    %v87 = vld [vmem:[%s71 + $0x8] sm:$0xff]
    %v88 = vld [vmem:[%s71 + $0x10] sm:$0xff]
    %v89 = vld [vmem:[%s71 + $0x18] sm:$0xff]
    %v90 = vmax.f32 %v82, 0.0
    %v91 = vmax.f32 %v83, 0.0
    %v92 = vmax.f32 %v84, 0.0
    %v93 = vmax.f32 %v85, 0.0
    %v94 = vmul.f32 %v82, %v86
    %v95 = vmul.f32 %v83, %v87
    %v96 = vmul.f32 %v84, %v88
    %v97 = vmul.f32 %v85, %v89
    %v98 = vsub.f32 %v90, %v94
    %v99 = vsub.f32 %v91, %v95
    %v100 = vsub.f32 %v92, %v96
    %v101 = vsub.f32 %v93, %v97
    %v102 = vand.u32 2147483647, %v82
    %v103 = vand.u32 2147483647, %v83
    %v104 = vand.u32 2147483647, %v84
    %v105 = vand.u32 2147483647, %v85
    %v106 = vsub.f32 0.0, %v102
    %v107 = vsub.f32 0.0, %v103
    %v108 = vsub.f32 0.0, %v104
    %v109 = vsub.f32 0.0, %v105
    %v110 = vmul.f32 %v106, 1.442695
    %v111 = vpow.pop %v110
    %v112 = vmul.f32 %v107, 1.442695
    %v113 = vpow.pop %v112
    %v114 = vmul.f32 %v108, 1.442695
    %v115 = vpow.pop %v114
    %v116 = vmul.f32 %v109, 1.442695
    %v117 = vpow.pop %v116
    %v118 = vadd.f32 %v111, 1.0
    %v119 = vlog2.pop %v118
    %v120 = vmul.f32 %v119, 0.6931472
    %v121 = vmul.f32 -0.5, %v111
    %v122 = vadd.f32 %v121, 1.0
    %v123 = vmul.f32 %v122, %v111
    %v124 = vand.u32 2147483647, %v111
    %vm125 = vcmp.lt.f32.partialorder %v124, 0.0004427343
    %v126 = vsel %vm125, %v123, %v120
    %v127 = vadd.f32 %v113, 1.0
    %v128 = vlog2.pop %v127
    %v129 = vmul.f32 %v128, 0.6931472
    %v130 = vmul.f32 -0.5, %v113
    %v131 = vadd.f32 %v130, 1.0
    %v132 = vmul.f32 %v131, %v113
    %v133 = vand.u32 2147483647, %v113
    %vm134 = vcmp.lt.f32.partialorder %v133, 0.0004427343
    %v135 = vsel %vm134, %v132, %v129
    %v136 = vadd.f32 %v115, 1.0
    %v137 = vlog2.pop %v136
    %v138 = vmul.f32 %v137, 0.6931472
    %v139 = vmul.f32 -0.5, %v115
    %v140 = vadd.f32 %v139, 1.0
    %v141 = vmul.f32 %v140, %v115
    %v142 = vand.u32 2147483647, %v115
    %vm143 = vcmp.lt.f32.partialorder %v142, 0.0004427343
    %v144 = vsel %vm143, %v141, %v138
    %v145 = vadd.f32 %v117, 1.0
    %v146 = vlog2.pop %v145
    %v147 = vmul.f32 %v146, 0.6931472
    %v148 = vmul.f32 -0.5, %v117
    %v149 = vadd.f32 %v148, 1.0
    %v150 = vmul.f32 %v149, %v117
    %v151 = vand.u32 2147483647, %v117
    %vm152 = vcmp.lt.f32.partialorder %v151, 0.0004427343
    %v153 = vsel %vm152, %v150, %v147
    %v154 = vadd.f32 %v98, %v126
    %v155 = vadd.f32 %v99, %v135
    %v156 = vadd.f32 %v100, %v144
    %v157 = vadd.f32 %v101, %v153
    %v158 = vsub.f32 0.0, %v154
    %v159 = vsub.f32 0.0, %v155
    %v160 = vsub.f32 0.0, %v156
    %v161 = vsub.f32 0.0, %v157
    %v162 = vmul.f32 %v158, 1.442695
    %v163 = vpow.pop %v162
    %v164 = vmul.f32 %v159, 1.442695
    %v165 = vpow.pop %v164
    %v166 = vmul.f32 %v160, 1.442695
    %v167 = vpow.pop %v166
    %v168 = vmul.f32 %v161, 1.442695
    %v169 = vpow.pop %v168
    %v170 = vsub.f32 1.0, %v163
    %v171 = vsub.f32 1.0, %v165
    %v172 = vsub.f32 1.0, %v167
    %v173 = vsub.f32 1.0, %v169
    %v174 = vmul.f32 %v170, %v170
    %v175 = vmul.f32 %v171, %v171
    %v176 = vmul.f32 %v172, %v172
    %v177 = vmul.f32 %v173, %v173
    %v178 = vmul.f32 %v174, %v154
    %v179 = vmul.f32 %v175, %v155
    %v180 = vmul.f32 %v176, %v156
    %v181 = vmul.f32 %v177, %v157
    %v182 = vlaneseq
    %v183 = vshrl.u32 %v182, 7
    %v184 = vadd.s32 %v183, 8
    %v185 = vadd.s32 %v183, 16
    %v186 = vadd.s32 %v183, 24
    %v187 = vlaneseq
    %v188 = vand.u32 %v187, 127
    %v189 = vmul.u32 %v183, 128
    %v190 = vmul.u32 %v184, 128
    %v191 = vmul.u32 %v185, 128
    %v192 = vmul.u32 %v186, 128
    %v193 = vadd.s32 %v189, %v188
    %v194 = vadd.s32 %v190, %v188
    %v195 = vadd.s32 %v191, %v188
    %v196 = vadd.s32 %v192, %v188
    %s197 = smul.u32 %s76, 4096
    %s198 = ssub.s32 32, %s197
    %v199 = vstv %s198
    %vm200 = vcmp.lt.s32.totalorder %v193, %v199
    %vm201 = vcmp.lt.s32.totalorder %v194, %v199
    %vm202 = vcmp.lt.s32.totalorder %v195, %v199
    %vm203 = vcmp.lt.s32.totalorder %v196, %v199
    %v204 = vsel %vm200, %v178, 0.0
    %v205 = vsel %vm201, %v179, 0.0
    %v206 = vsel %vm202, %v180, 0.0
    %v207 = vsel %vm203, %v181, 0.0
    %v208 = vld [vmem:[#allocation2] sm:$0xff]
    %v209 = vadd.f32 %v204, %v205
    %v210 = vadd.f32 %v209, %v206
    %v211 = vadd.f32 %v210, %v207
    %v212 = vadd.f32 %v208, %v211
    %213 = vst [vmem:[#allocation2] sm:$0xff] %v212
    // Predicated region
    $region14: #{focal_loss.1} parent=1 // pred_check
      %p214 = pneg %p77
    $region15: #{focal_loss.1} parent=1 // pred_check_branch
      %216 = sbr.rel (%p214) target = $region17
    $region16: #{focal_loss.1} parent=1 // pred_region
      %v217 = vld [vmem:[#allocation2] sm:$0xff]
      %218 = vadd.xlane.f32.xlu0 %v217
      %v219 = vpop.xlane.xlu0 %218
      %v220 = vrot.slane %v219, 4
      %v221 = vadd.f32 %v219, %v220
      %v222 = vrot.slane %v221, 2
      %v223 = vadd.f32 %v221, %v222
      %v224 = vrot.slane %v223, 1
      %v225 = vadd.f32 %v223, %v224
      %s226 = vtos %v225
      %s227 = smul.f32 %s226, 0.0078125
      %v228 = vstv %s227
      %vm229 = vcmask 0
      %230 = vst.msk [vmem:[#allocation3] sm:$0x1] %vm229, %v228
    $region17: #{focal_loss.1} parent=1 // pred_fallthru
      _
    // Predicated region
    $region18: #{focal_loss.1} parent=1 // pred_check
      _
    $region19: #{focal_loss.1} parent=1 // pred_check_branch
      %232 = sbr.rel (0) target = $region21
    $region20: #{focal_loss.1} parent=1 // pred_region
      %s234 = ssub.s32 16, 16
      %235 = vsyncadd [#allocation4], %s234
      %s237 = sshll.u32 [#allocation3], 4
      %s238 = int_to_ptr.vmem [resolvable:$true] %s237
      %240 = dma.vmem_to_hbm [thread:$0]  %s238, 16, %s2, [#allocation4]
    $region21: #{focal_loss.1} parent=1 // pred_fallthru
      _
    // Predicated region
    $region22: #{focal_loss.1} parent=1 // pred_check
      _
    $region23: #{focal_loss.1} parent=1 // pred_check_branch
      %242 = sbr.rel (0) target = $region25
    $region24: #{focal_loss.1} parent=1 // pred_region
      %243 = dma.done [#allocation4], 16
    $region25: #{focal_loss.1} parent=1 // pred_fallthru
      _
    %244 = vsyncpa [#allocation4], 1

</llo_original>
